<compile_context>
chip_gen: v6e
topology: v6e:2x2x1
jax: 0.10.0
libtpu: 0.0.40
codegen_flags: <defaults>
</compile_context>

<pallas_src>
import math

import jax
import jax.numpy as jnp
import numpy as np
from jax.experimental import pallas as pl
from jax.experimental.pallas import tpu as pltpu

# ---- "args" (small, consistent with the module) -----------------------------
S, B = 8, 4            # sequence length, batch size (idx is (S, B))
VOCAB = 64             # args.entrez_size
EMB = 32               # args.emb_size
PROJ = 32              # args.proj_embed_sz
N_EMB = 2              # len(args.embedding_type)


# ---- Pallas kernel -----------------------------------------------------------
def proj_sum_kernel(idx_ref,      # (T, 1) int32 token indices
                    tfold_ref,    # (VOCAB, 2*PROJ+1) = [tp0 | tp1 | dcol]
                    out_ref):     # (T, PROJ)
    t = idx_ref.shape[0]
    vocab = tfold_ref.shape[0]

    # Embedding gather for BOTH types + per-type projection (+bias) + attention
    # logit difference, all pre-folded into the table -> ONE one-hot MXU matmul.
    # Exact: each one-hot row contains a single 1.0, so the dot reproduces the
    # folded table row bit-for-bit.
    lane_ids = jax.lax.broadcasted_iota(jnp.int32, (t, vocab), 1)
    onehot = (lane_ids == idx_ref[...]).astype(jnp.float32)          # (T, VOCAB)
    r = jnp.dot(onehot, tfold_ref[...],
                preferred_element_type=jnp.float32)                  # (T, 2*PROJ+1)

    p0 = r[:, :PROJ]                                                 # proj for type 0
    p1 = r[:, PROJ:2 * PROJ]                                         # proj for type 1
    d = r[:, 2 * PROJ:2 * PROJ + 1]                                  # attn logit diff a0 - a1

    # 2-way softmax == sigmoid of the logit difference (exact rewrite);
    # exp and the reciprocal both run on the otherwise-idle EUP slot.
    m0 = pl.reciprocal(1.0 + jnp.exp(-d), approx=False)              # (T, 1)

    # attended sum over embedding types + ReLU (args.nonlin == 'relu');
    # rewritten as p1 + (p0 - p1)*m0 to drop one broadcast multiply.
    out_ref[...] = jnp.maximum(p1 + (p0 - p1) * m0, 0.0)


# ---- wrapper: one-time exact parameter folds + jitted per-call path ----------
def make_proj_sum_embedder(table0, table1, w0, b0, w1, b1, aw0, ab0, aw1, ab1,
                           *, row_tile=512):
    """Folds parameters once; returns apply(idx: (S,B) int32) -> (S,B,PROJ) f32."""
    # Pre-project the tables (exact: the old block-diagonal projection matmul
    # folded into the table) and append the attention logit-difference column.
    tp0 = table0 @ w0 + b0                                           # (VOCAB, PROJ)
    tp1 = table1 @ w1 + b1                                           # (VOCAB, PROJ)
    v = (aw0 @ aw1).reshape(PROJ)                                    # folded attn head
    dcol = (tp0 - tp1) @ v                                           # (VOCAB,)
    tfold = jnp.concatenate([tp0, tp1, dcol[:, None]], axis=1)       # (VOCAB, 2*PROJ+1)
    tfold = jax.device_put(tfold)                                    # materialize once
    # The folded attention bias (ab0 @ aw1 + ab1) is identical for both
    # embedding types and cancels exactly in the 2-way softmax -> dropped.

    @jax.jit
    def apply(idx):
        s_len, b_size = idx.shape
        n_rows = s_len * b_size
        tile = min(row_tile, n_rows)                                 # static
        idx2d = idx.reshape(n_rows, 1).astype(jnp.int32)

        out_flat = pl.pallas_call(
            proj_sum_kernel,
            out_shape=jax.ShapeDtypeStruct((n_rows, PROJ), jnp.float32),
            grid=(pl.cdiv(n_rows, tile),),                           # row tiles
            in_specs=[
                pl.BlockSpec((tile, 1), lambda i: (i, 0)),
                pl.BlockSpec((VOCAB, 2 * PROJ + 1), lambda i: (0, 0)),  # resident
            ],
            out_specs=pl.BlockSpec((tile, PROJ), lambda i: (i, 0)),
            compiler_params=pltpu.CompilerParams(
                dimension_semantics=("parallel",)),                  # v7x: both TCs
        )(idx2d, tfold)
        return out_flat.reshape(s_len, b_size, PROJ)

    return apply


# ---- deterministic parameter init (shapes from the module's __init__) --------
def xavier_uniform(key, fan_in, fan_out):
    bound = math.sqrt(6.0 / (fan_in + fan_out))
    return jax.random.uniform(key, (fan_in, fan_out), jnp.float32, -bound, bound)


def bias_init(key, n):
    return jax.random.uniform(key, (1, n), jnp.float32, -1e-4, 1e-4)


# ---- pure-JAX reference that mirrors the PyTorch forward exactly -------------
def reference_forward(idx, table0, table1, w0, b0, w1, b1, aw0, ab0, aw1, ab1):
    x0 = table0[idx]                              # (S, B, EMB)
    x1 = table1[idx]
    p0 = x0 @ w0 + b0                             # (S, B, PROJ)
    p1 = x1 @ w1 + b1
    pc = jnp.stack([p0, p1], axis=2)              # (S, B, n_emb, PROJ)
    h = pc @ aw0 + ab0                            # (S, B, n_emb, 2)
    logits = (h @ aw1)[..., 0] + ab1[0, 0]        # (S, B, n_emb)
    m = jax.nn.softmax(logits, axis=-1)
    out = jnp.sum(pc * m[..., None], axis=2)
    return jax.nn.relu(out)


if __name__ == "__main__":
    key = jax.random.PRNGKey(0)
    keys = jax.random.split(key, 11)

    # SingleEmbedder tables: uniform(-sqrt(3/emb_size), sqrt(3/emb_size))
    # TODO(synk): pretrained-embedding file loading / mean-centering of
    # SingleEmbedder skipped (requires reading embedding files); deterministic
    # random init with the module's bound instead.
    bound = math.sqrt(3.0 / EMB)
    table0 = jax.random.uniform(keys[0], (VOCAB, EMB), jnp.float32, -bound, bound)
    table1 = jax.random.uniform(keys[1], (VOCAB, EMB), jnp.float32, -bound, bound)

    # projectors (stored as (in, out); PyTorch stores (out, in) — layout only)
    w0 = xavier_uniform(keys[2], EMB, PROJ)
    b0 = bias_init(keys[3], PROJ)
    w1 = xavier_uniform(keys[4], EMB, PROJ)
    b1 = bias_init(keys[5], PROJ)

    # attention net ('no_dep_softmax'): Linear(PROJ, 2) then Linear(2, 1)
    aw0 = xavier_uniform(keys[6], PROJ, 2)
    ab0 = bias_init(keys[7], 2)
    aw1 = xavier_uniform(keys[8], 2, 1)          # stored as (in, out) = (2, 1)
    ab1 = bias_init(keys[9], 1)                  # (1, 1)

    # token indices (the module looks a single entrez up; batched here as (S, B))
    idx = jax.random.randint(keys[10], (S, B), 0, VOCAB)

    # one-time fold (hoisted), then the cheap per-call path
    embed = make_proj_sum_embedder(table0, table1, w0, b0, w1, b1,
                                   aw0, ab0, aw1, ab1)
    out = embed(idx)
    jax.block_until_ready(out)

    ref = reference_forward(idx, table0, table1, w0, b0, w1, b1, aw0, ab0, aw1, ab1)
    np.testing.assert_allclose(np.asarray(out), np.asarray(ref), rtol=1e-5, atol=1e-5)

    print("KERNEL_OK")
</pallas_src>

<mosaic_0001>
module attributes {stable_mosaic.version = 11 : i64} {
  func.func @proj_sum_kernel(%arg0: i32, %arg1: memref<32x1xi32, #tpu.memory_space<vmem>>, %arg2: memref<64x65xf32, #tpu.memory_space<vmem>>, %arg3: memref<32x32xf32, #tpu.memory_space<vmem>>) attributes {dimension_semantics = [#tpu.dimension_semantics<parallel>], iteration_bounds = array<i64: 1>, scalar_prefetch = 0 : i64, scratch_operands = 0 : i64, tpu.core_type = #tpu.core_type<tc>, window_params = [{transform_indices = @transform_0, window_bounds = array<i64: 32, 1>}, {pipeline_mode = #tpu.pipeline_mode<synchronous>, transform_indices = @transform_1, window_bounds = array<i64: 64, 65>}, {transform_indices = @transform_2, window_bounds = array<i64: 32, 32>}]} {
    %0 = tpu.iota {dimensions = array<i32: 1>} : vector<32x64xi32>
    %c0 = arith.constant 0 : index
    %c0_0 = arith.constant 0 : index
    %1 = vector.load %arg1[%c0, %c0_0] : memref<32x1xi32, #tpu.memory_space<vmem>>, vector<32x1xi32>
    %2 = vector.broadcast %1 : vector<32x1xi32> to vector<32x64xi32>
    %3 = arith.cmpi eq, %0, %2 : vector<32x64xi32>
    %4 = arith.extui %3 : vector<32x64xi1> to vector<32x64xi32>
    %5 = arith.sitofp %4 : vector<32x64xi32> to vector<32x64xf32>
    %c0_1 = arith.constant 0 : index
    %c0_2 = arith.constant 0 : index
    %6 = vector.load %arg2[%c0_1, %c0_2] : memref<64x65xf32, #tpu.memory_space<vmem>>, vector<64x65xf32>
    %cst = arith.constant dense<0.000000e+00> : vector<32x65xf32>
    %7 = tpu.matmul %5, %6, %cst {dimension_numbers = #tpu.dot_dimension_numbers<[1], [0], [0], [1], [0, 0, 1, 1], [], []>} : vector<32x64xf32>, vector<64x65xf32>, vector<32x65xf32> -> vector<32x65xf32>
    %8 = vector.extract_strided_slice %7 {offsets = [0, 0], sizes = [32, 32], strides = [1, 1]} : vector<32x65xf32> to vector<32x32xf32>
    %9 = vector.extract_strided_slice %7 {offsets = [0, 32], sizes = [32, 32], strides = [1, 1]} : vector<32x65xf32> to vector<32x32xf32>
    %10 = vector.extract_strided_slice %7 {offsets = [0, 64], sizes = [32, 1], strides = [1, 1]} : vector<32x65xf32> to vector<32x1xf32>
    %cst_3 = arith.constant 0.000000e+00 : f32
    %11 = vector.broadcast %cst_3 : f32 to vector<32x1xf32>
    %12 = arith.subf %11, %10 : vector<32x1xf32>
    %13 = math.exp %12 : vector<32x1xf32>
    %cst_4 = arith.constant 1.000000e+00 : f32
    %14 = vector.broadcast %cst_4 : f32 to vector<32x1xf32>
    %15 = arith.addf %14, %13 : vector<32x1xf32>
    %16 = tpu.reciprocal %15 : vector<32x1xf32> -> vector<32x1xf32>
    %17 = arith.subf %8, %9 : vector<32x32xf32>
    %18 = vector.broadcast %16 : vector<32x1xf32> to vector<32x32xf32>
    %19 = arith.mulf %17, %18 : vector<32x32xf32>
    %20 = arith.addf %9, %19 : vector<32x32xf32>
    %cst_5 = arith.constant 0.000000e+00 : f32
    %21 = vector.broadcast %cst_5 : f32 to vector<32x32xf32>
    %22 = arith.maximumf %20, %21 : vector<32x32xf32>
    %c0_6 = arith.constant 0 : index
    %c0_7 = arith.constant 0 : index
    %23 = vector.load %arg3[%c0_6, %c0_7] : memref<32x32xf32, #tpu.memory_space<vmem>>, vector<32x32xf32>
    tpu.vector_store %arg3[%c0_6, %c0_7], %22 {strides = array<i32>} : memref<32x32xf32, #tpu.memory_space<vmem>>, vector<32x32xf32>,
    return
  }
  func.func @transform_0(%arg0: i32) -> (i32, i32) {
    %c0_i32 = arith.constant 0 : i32
    %c0_i32_0 = arith.constant 0 : i32
    return %arg0, %c0_i32 : i32, i32
  }
  func.func @transform_1(%arg0: i32) -> (i32, i32) {
    %c0_i32 = arith.constant 0 : i32
    %c0_i32_0 = arith.constant 0 : i32
    %c0_i32_1 = arith.constant 0 : i32
    return %c0_i32, %c0_i32_0 : i32, i32
  }
  func.func @transform_2(%arg0: i32) -> (i32, i32) {
    %c0_i32 = arith.constant 0 : i32
    %c0_i32_0 = arith.constant 0 : i32
    return %arg0, %c0_i32 : i32, i32
  }
}

</mosaic_0001>

<llo_original>
// kernel: apply.1
$region0: #{apply.1}
  #allocation0 [shape = 'u32[]', space=smem, size = 0x4, offset = 0x4, fixed_abs, tag = 'smem constant byte address 0x4 - core index']
  #allocation1 [shape = 'u32[144,128]{1,0:T(1,128)}', space=vmem, size = 0x12000, scoped, tag = 'internal scratch']
  %s0 = inlined_call_operand.vmem [shape: s32[32,1], index: 0, kind: input, shape index: {}]
  %s1 = inlined_call_operand.hbm [shape: f32[64,65], index: 1, kind: input, shape index: {}]
  %s2 = inlined_call_operand.hbm [shape: f32[32,32], index: 2, kind: output, shape index: {}]
  %s3 = sld [smem:[#allocation0]]
  $region22: #{apply.1} parent=0
    _
  %s5 = ssub.s32 1, %s3
  %s6 = scalar_select 0, %s5, %s3
  $region1: #{apply.1} parent=0
    #allocation2 [shape = 'u8[32768]{0}', space=vmem, size = 0x8000, scoped, tag = 'input window, operand 1, single buffered']
    #allocation3 [shape = 's32[1]{0}', space=sflag, size = 0x4, scoped, tag = 'scoped memory for apply.1']
    #allocation4 [shape = 's32[1]{0}', space=sflag, size = 0x4, scoped, tag = 'scoped memory for apply.1']
    #allocation5 [shape = 'u8[16384]{0}', space=vmem, size = 0x4000, scoped, tag = 'output window, operand 0, single buffered']
    %7 = vsyncpa [#allocation3], 0
    %8 = vsyncpa [#allocation4], 0
    // Predicated region
    $region2: #{apply.1} parent=1 // pred_check
      _
    $region3: #{apply.1} parent=1 // pred_check_branch
      %10 = sbr.rel (0) target = $region5
    $region4: #{apply.1} parent=1 // pred_region
      _
    $region5: #{apply.1} parent=1 // pred_fallthru
      _
    // Predicated region
    $region6: #{apply.1} parent=1 // pred_check
      _
    $region7: #{apply.1} parent=1 // pred_check_branch
      %12 = sbr.rel (0) target = $region9
    $region8: #{apply.1} parent=1 // pred_region
      %s14 = ssub.s32 1024, 1024
      %15 = vsyncadd [#allocation3], %s14
      %s16 = sshll.u32 [#allocation2], 4
      %s17 = int_to_ptr.vmem [resolvable:$true] %s16
      %22 = dma.hbm_to_vmem [thread:$0]  %s1, 1024, %s17, [#allocation3], 128, 128, 8
    $region9: #{apply.1} parent=1 // pred_fallthru
      _
    // Predicated region
    $region10: #{apply.1} parent=1 // pred_check
      _
    $region11: #{apply.1} parent=1 // pred_check_branch
      %24 = sbr.rel (0) target = $region13
    $region12: #{apply.1} parent=1 // pred_region
      %25 = dma.done [#allocation3], 1024
    $region13: #{apply.1} parent=1 // pred_fallthru
      _
    %v26 = vlaneseq
    %v27 = vand.u32 %v26, 127
    %v28 = vld [vmem:[%s0] sm:$0xff]
    %v29 = vld [vmem:[%s0 + $0x8] sm:$0xff]
    %v30 = vld [vmem:[%s0 + $0x10] sm:$0xff]
    %v31 = vld [vmem:[%s0 + $0x18] sm:$0xff]
    %32 = vset.pattern.permute.xlu0 0
    %33 = vperm.xlu0 %32, %v28
    %v34 = vpop.permute.xlu0 %33
    %35 = vset.pattern.permute.xlu0 0
    %36 = vperm.xlu0 %35, %v29
    %v37 = vpop.permute.xlu0 %36
    %38 = vset.pattern.permute.xlu0 0
    %39 = vperm.xlu0 %38, %v30
    %v40 = vpop.permute.xlu0 %39
    %41 = vset.pattern.permute.xlu0 0
    %42 = vperm.xlu0 %41, %v31
    %v43 = vpop.permute.xlu0 %42
    %vm44 = vcmp.eq.s32.totalorder %v27, %v34
    %vm45 = vcmp.eq.s32.totalorder %v27, %v37
    %vm46 = vcmp.eq.s32.totalorder %v27, %v40
    %vm47 = vcmp.eq.s32.totalorder %v27, %v43
    %v48 = vsel %vm44, 1, 0
    %v49 = vsel %vm45, 1, 0
    %v50 = vsel %vm46, 1, 0
    %v51 = vsel %vm47, 1, 0
    %v52 = vcvt.s32.f32 %v48
    %v53 = vcvt.s32.f32 %v49
    %v54 = vcvt.s32.f32 %v50
    %v55 = vcvt.s32.f32 %v51
    %v56 = vld [vmem:[#allocation2] sm:$0xff]
    %v57 = vld [vmem:[#allocation2 + $0x8] sm:$0xff]
    %v58 = vld [vmem:[#allocation2 + $0x10] sm:$0xff]
    %v59 = vld [vmem:[#allocation2 + $0x18] sm:$0xff]
    %v60 = vld [vmem:[#allocation2 + $0x20] sm:$0xff]
    %v61 = vld [vmem:[#allocation2 + $0x28] sm:$0xff]
    %v62 = vld [vmem:[#allocation2 + $0x30] sm:$0xff]
    %v63 = vld [vmem:[#allocation2 + $0x38] sm:$0xff]
    %vm64 = vcmask 523264
    %v66 = vsel %vm64, %v52, 0
    %v69 = vsel %vm64, %v53, 0
    %v72 = vsel %vm64, %v54, 0
    %v75 = vsel %vm64, %v55, 0
    %77 = vmatprep.subr.mxu0 0.0
    %78 = vmatpush1.msra.mxu0 0.0
    %79 = vmatprep.subr.mxu0 0.0
    %80 = vmatpush1.msra.mxu0 0.0
    %81 = vmatprep.subr.mxu0 0.0
    %82 = vmatpush1.msra.mxu0 0.0
    %83 = vmatprep.subr.mxu0 0.0
    %84 = vmatpush1.msra.mxu0 0.0
    %85 = vmatprep.subr.mxu0 0.0
    %86 = vmatpush1.msra.mxu0 0.0
    %87 = vmatprep.subr.mxu0 0.0
    %88 = vmatpush1.msra.mxu0 0.0
    %89 = vmatprep.subr.mxu0 0.0
    %90 = vmatpush1.msra.mxu0 0.0
    %91 = vmatprep.subr.mxu0 0.0
    %92 = vmatpush1.msra.mxu0 0.0
    %93 = vmatprep.subr.mxu0 0.0
    %94 = vmatpush1.msra.mxu0 %v63
    %95 = vmatprep.subr.mxu0 0.0
    %96 = vmatpush1.msra.mxu0 %v62
    %97 = vmatprep.subr.mxu0 0.0
    %98 = vmatpush1.msra.mxu0 %v61
    %99 = vmatprep.subr.mxu0 0.0
    %100 = vmatpush1.msra.mxu0 %v60
    %101 = vmatprep.subr.mxu0 0.0
    %102 = vmatpush1.msra.mxu0 %v59
    %103 = vmatprep.subr.mxu0 0.0
    %104 = vmatpush1.msra.mxu0 %v58
    %105 = vmatprep.subr.mxu0 0.0
    %106 = vmatpush1.msra.mxu0 %v57
    %107 = vmatprep.subr.mxu0 0.0
    %108 = vmatpush1.msra.mxu0 %v56
    %109 = vmatprep.subr.mxu0 0.0
    %110 = vmatpush2.msra.mxu0 0.0
    %111 = vmatprep.subr.mxu0 0.0
    %112 = vmatpush2.msra.mxu0 0.0
    %113 = vmatprep.subr.mxu0 0.0
    %114 = vmatpush2.msra.mxu0 0.0
    %115 = vmatprep.subr.mxu0 0.0
    %116 = vmatpush2.msra.mxu0 0.0
    %117 = vmatprep.subr.mxu0 0.0
    %118 = vmatpush2.msra.mxu0 0.0
    %119 = vmatprep.subr.mxu0 0.0
    %120 = vmatpush2.msra.mxu0 0.0
    %121 = vmatprep.subr.mxu0 0.0
    %122 = vmatpush2.msra.mxu0 0.0
    %123 = vmatprep.subr.mxu0 0.0
    %124 = vmatpush2.msra.mxu0 0.0
    %125 = vmatprep.subr.mxu0 0.0
    %126 = vmatpush2.msra.mxu0 0.0
    %127 = vmatprep.subr.mxu0 0.0
    %128 = vmatpush2.msra.mxu0 0.0
    %129 = vmatprep.subr.mxu0 0.0
    %130 = vmatpush2.msra.mxu0 0.0
    %131 = vmatprep.subr.mxu0 0.0
    %132 = vmatpush2.msra.mxu0 0.0
    %133 = vmatprep.subr.mxu0 0.0
    %134 = vmatpush2.msra.mxu0 0.0
    %135 = vmatprep.subr.mxu0 0.0
    %136 = vmatpush2.msra.mxu0 0.0
    %137 = vmatprep.subr.mxu0 0.0
    %138 = vmatpush2.msra.mxu0 0.0
    %139 = vmatprep.subr.mxu0 0.0
    %140 = vmatpush2.msra.mxu0 0.0
    %141 = vmatprep.mubr.f32.mxu0 0.0
    %142 = vmatmul.mubr.f32.gmra.mxu0 %v66
    %v143 = vpop.f32.mrf.mxu0
    %v144 = vadd.f32 0.0, %v143
    %v145 = vpop.f32.mrf.mxu0
    %146 = vmatprep.mubr.f32.mxu0 0.0
    %147 = vmatmul.mubr.f32.gmra.mxu0 %v69
    %v148 = vpop.f32.mrf.mxu0
    %v149 = vadd.f32 0.0, %v148
    %v150 = vpop.f32.mrf.mxu0
    %151 = vmatprep.mubr.f32.mxu0 0.0
    %152 = vmatmul.mubr.f32.gmra.mxu0 %v72
    %v153 = vpop.f32.mrf.mxu0
    %v154 = vadd.f32 0.0, %v153
    %v155 = vpop.f32.mrf.mxu0
    %156 = vmatprep.mubr.f32.mxu0 0.0
    %157 = vmatmul.mubr.f32.gmra.mxu0 %v75
    %v158 = vpop.f32.mrf.mxu0
    %v159 = vadd.f32 0.0, %v158
    %v160 = vpop.f32.mrf.mxu0
    %161 = vdwg.mxu0
    %v162 = vsub.f32 0.0, %v144
    %v163 = vsub.f32 0.0, %v149
    %v164 = vsub.f32 0.0, %v154
    %v165 = vsub.f32 0.0, %v159
    %v166 = vmul.f32 %v162, 1.442695
    %v167 = vpow.pop %v166
    %v168 = vmul.f32 %v163, 1.442695
    %v169 = vpow.pop %v168
    %v170 = vmul.f32 %v164, 1.442695
    %v171 = vpow.pop %v170
    %v172 = vmul.f32 %v165, 1.442695
    %v173 = vpow.pop %v172
    %v174 = vadd.f32 %v167, 1.0
    %v175 = vadd.f32 %v169, 1.0
    %v176 = vadd.f32 %v171, 1.0
    %v177 = vadd.f32 %v173, 1.0
    %v178 = vrcp.pop %v174
    %v179 = vrcp.pop %v175
    %v180 = vrcp.pop %v176
    %v181 = vrcp.pop %v177
    %186 = vrot.lane.b32.xlu0 %v144, 96
    %v187 = vpop.permute.xlu0 %186
    %188 = vrot.lane.b32.xlu0 %v149, 96
    %v189 = vpop.permute.xlu0 %188
    %190 = vrot.lane.b32.xlu0 %v154, 96
    %v191 = vpop.permute.xlu0 %190
    %192 = vrot.lane.b32.xlu0 %v159, 96
    %v193 = vpop.permute.xlu0 %192
    %v198 = vsub.f32 %v144, %v187
    %v199 = vsub.f32 %v149, %v189
    %v200 = vsub.f32 %v154, %v191
    %v201 = vsub.f32 %v159, %v193
    %203 = vset.pattern.permute.xlu0 64
    %204 = vperm.xlu0 %203, %v178
    %v205 = vpop.permute.xlu0 %204
    %208 = vset.pattern.permute.xlu0 64
    %209 = vperm.xlu0 %208, %v179
    %v210 = vpop.permute.xlu0 %209
    %213 = vset.pattern.permute.xlu0 64
    %214 = vperm.xlu0 %213, %v180
    %v215 = vpop.permute.xlu0 %214
    %218 = vset.pattern.permute.xlu0 64
    %219 = vperm.xlu0 %218, %v181
    %v220 = vpop.permute.xlu0 %219
    %v222 = vmul.f32 %v198, %v205
    %v223 = vmul.f32 %v199, %v210
    %v224 = vmul.f32 %v200, %v215
    %v225 = vmul.f32 %v201, %v220
    %230 = vrot.lane.b32.xlu0 %v222, 32
    %v231 = vpop.permute.xlu0 %230
    %232 = vrot.lane.b32.xlu0 %v223, 32
    %v233 = vpop.permute.xlu0 %232
    %234 = vrot.lane.b32.xlu0 %v224, 32
    %v235 = vpop.permute.xlu0 %234
    %236 = vrot.lane.b32.xlu0 %v225, 32
    %v237 = vpop.permute.xlu0 %236
    %v242 = vadd.f32 %v144, %v231
    %v243 = vadd.f32 %v149, %v233
    %v244 = vadd.f32 %v154, %v235
    %v245 = vadd.f32 %v159, %v237
    %v246 = vmax.f32 %v242, 0.0
    %v247 = vmax.f32 %v243, 0.0
    %v248 = vmax.f32 %v244, 0.0
    %v249 = vmax.f32 %v245, 0.0
    %254 = vrot.lane.b32.xlu0 %v246, 96
    %v255 = vpop.permute.xlu0 %254
    %256 = vrot.lane.b32.xlu0 %v247, 96
    %v257 = vpop.permute.xlu0 %256
    %258 = vrot.lane.b32.xlu0 %v248, 96
    %v259 = vpop.permute.xlu0 %258
    %260 = vrot.lane.b32.xlu0 %v249, 96
    %v261 = vpop.permute.xlu0 %260
    %vm266 = vcmask 261120
    %267 = vst.msk [vmem:[#allocation5] sm:$0xff] %vm266, %v255
    %268 = vst.msk [vmem:[#allocation5 + $0x8] sm:$0xff] %vm266, %v257
    %269 = vst.msk [vmem:[#allocation5 + $0x10] sm:$0xff] %vm266, %v259
    %270 = vst.msk [vmem:[#allocation5 + $0x18] sm:$0xff] %vm266, %v261
    // Predicated region
    $region14: #{apply.1} parent=1 // pred_check
      _
    $region15: #{apply.1} parent=1 // pred_check_branch
      %272 = sbr.rel (0) target = $region17
    $region16: #{apply.1} parent=1 // pred_region
      %s274 = ssub.s32 512, 512
      %275 = vsyncadd [#allocation4], %s274
      %s276 = sshll.u32 [#allocation5], 4
      %s277 = int_to_ptr.vmem [resolvable:$true] %s276
      %282 = dma.vmem_to_hbm [thread:$0]  %s277, 512, %s2, [#allocation4], 128, 128, 8
    $region17: #{apply.1} parent=1 // pred_fallthru
      _
    // Predicated region
    $region18: #{apply.1} parent=1 // pred_check
      _
    $region19: #{apply.1} parent=1 // pred_check_branch
      %284 = sbr.rel (0) target = $region21
    $region20: #{apply.1} parent=1 // pred_region
      %285 = dma.done [#allocation4], 512
    $region21: #{apply.1} parent=1 // pred_fallthru
      _
    %286 = vsyncpa [#allocation3], 1
    %287 = vsyncpa [#allocation4], 1

</llo_original>
